<compile_context>
chip_gen: v6e
topology: v6e:2x2x1
jax: 0.10.0
libtpu: 0.0.40
codegen_flags: <defaults>
</compile_context>

<pallas_src>
import functools

import jax
import jax.numpy as jnp
from jax.experimental import pallas as pl
from jax.experimental.pallas import tpu as pltpu


# ---------------------------------------------------------------------------
# small helpers
# ---------------------------------------------------------------------------
def _round_up(a: int, b: int) -> int:
    return (a + b - 1) // b * b


def _cdiv(a: int, b: int) -> int:
    return (a + b - 1) // b


# ---------------------------------------------------------------------------
# Pallas kernel 1: fused  (x @ W) * scale + bias [+ residual] [-> relu]
# ---------------------------------------------------------------------------
def _mm_affine_kernel(*refs, relu: bool, has_residual: bool):
    if has_residual:
        x_ref, w_ref, s_ref, b_ref, r_ref, o_ref = refs
    else:
        x_ref, w_ref, s_ref, b_ref, o_ref = refs
        r_ref = None
    # Operands go to the MXU in their native dtype; accumulate in f32.
    y = jnp.dot(x_ref[...], w_ref[...], preferred_element_type=jnp.float32)
    y = y * s_ref[...] + b_ref[...]
    if r_ref is not None:
        y = y + r_ref[...].astype(jnp.float32)
    if relu:
        y = jnp.maximum(y, 0.0)
    o_ref[...] = y.astype(o_ref.dtype)


def fused_matmul_affine(x, w, scale, bias, *, residual=None, relu=False, tm=512):
    """[relu]((x @ w) * scale + bias [+ residual]) with Pallas.

    x: [N, K], w: [K, M], scale/bias: [M], residual: [N, M] or None.
    Rows are tiled with a large tile; the output channel axis is padded to a
    multiple of 128 so stores are lane-dense.
    """
    N, K = x.shape
    Kw, M = w.shape
    assert Kw == K, (Kw, K)

    sub = 8 if x.dtype.itemsize >= 4 else 16          # sublane granularity
    tm_eff = int(min(tm, _round_up(N, sub)))
    # Keep >= 2 grid steps when there are enough rows so the "parallel" axis
    # can be split across the two TensorCores on v7x (megacore).
    if _cdiv(N, tm_eff) < 2 and N >= 256:
        tm_eff = int(_round_up(_cdiv(N, 2), 128))

    Np = _round_up(N, tm_eff)
    Kp = _round_up(K, sub)
    Mp = _round_up(M, 128)                            # lane-dense output

    xp = jnp.pad(x, ((0, Np - N), (0, Kp - K))) if (Np != N or Kp != K) else x
    wp = jnp.pad(w, ((0, Kp - K), (0, Mp - M))) if (Kp != K or Mp != M) else w
    sp = jnp.pad(scale, (0, Mp - M)).reshape(1, Mp)
    bp = jnp.pad(bias, (0, Mp - M)).reshape(1, Mp)

    operands = [xp, wp, sp, bp]
    in_specs = [
        pl.BlockSpec((tm_eff, Kp), lambda i: (i, 0)),   # row tile of x
        # Loop-invariant operands: constant block index -> fetched only once.
        pl.BlockSpec((Kp, Mp), lambda i: (0, 0)),
        pl.BlockSpec((1, Mp), lambda i: (0, 0)),
        pl.BlockSpec((1, Mp), lambda i: (0, 0)),
    ]
    if residual is not None:
        rp = jnp.pad(residual, ((0, Np - N), (0, Mp - M)))
        operands.append(rp)
        in_specs.append(pl.BlockSpec((tm_eff, Mp), lambda i: (i, 0)))

    kernel = functools.partial(
        _mm_affine_kernel, relu=relu, has_residual=residual is not None)

    out = pl.pallas_call(
        kernel,
        out_shape=jax.ShapeDtypeStruct((Np, Mp), x.dtype),
        grid_spec=pltpu.PrefetchScalarGridSpec(
            num_scalar_prefetch=0,
            grid=(Np // tm_eff,),
            in_specs=in_specs,
            out_specs=pl.BlockSpec((tm_eff, Mp), lambda i: (i, 0)),
        ),
        compiler_params=pltpu.CompilerParams(
            dimension_semantics=("parallel",),
            vmem_limit_bytes=64 * 1024 * 1024,
        ),
    )(*operands)
    return out[:N, :M]


# ---------------------------------------------------------------------------
# Pallas kernel 2: softmax attention core for AttentionPool2d
# ---------------------------------------------------------------------------
def _attn_kernel(q_ref, k_ref, v_ref, o_ref, *, scale):
    q = q_ref[...]                                    # (1, L, Dh)
    k = k_ref[...]
    v = v_ref[...]
    s = jnp.einsum('blh,bmh->blm', q, k,
                   preferred_element_type=jnp.float32) * scale
    s = s - jnp.max(s, axis=-1, keepdims=True)
    p = jnp.exp(s)
    p = p / jnp.sum(p, axis=-1, keepdims=True)
    o = jnp.einsum('blm,bmh->blh', p.astype(v.dtype), v,
                   preferred_element_type=jnp.float32)
    o_ref[...] = o.astype(o_ref.dtype)


def mha_attention(q, k, v, *, scale):
    """q, k, v: [B*H, L, Dh] -> [B*H, L, Dh]; one (batch, head) per grid step."""
    BH, L, Dh = q.shape
    kernel = functools.partial(_attn_kernel, scale=float(scale))
    return pl.pallas_call(
        kernel,
        out_shape=jax.ShapeDtypeStruct((BH, L, Dh), q.dtype),
        grid_spec=pltpu.PrefetchScalarGridSpec(
            num_scalar_prefetch=0,
            grid=(BH,),
            in_specs=[pl.BlockSpec((1, L, Dh), lambda i: (i, 0, 0))] * 3,
            out_specs=pl.BlockSpec((1, L, Dh), lambda i: (i, 0, 0)),
        ),
        compiler_params=pltpu.CompilerParams(
            dimension_semantics=("parallel",)),
    )(q, k, v)


# ---------------------------------------------------------------------------
# JAX-side glue (layout only): im2col, avg-pool, BN folding
# ---------------------------------------------------------------------------
def _im2col_nhwc(x, kh, kw, stride, padding):
    B, H, W, C = x.shape
    xp = jnp.pad(x, ((0, 0), (padding, padding), (padding, padding), (0, 0)))
    Ho = (H + 2 * padding - kh) // stride + 1
    Wo = (W + 2 * padding - kw) // stride + 1
    cols = []
    for dy in range(kh):
        for dx in range(kw):
            cols.append(xp[:, dy:dy + stride * Ho:stride,
                           dx:dx + stride * Wo:stride, :])
    return jnp.concatenate(cols, axis=-1), Ho, Wo


def _avg_pool_nhwc(x, k):
    if k == 1:
        return x
    B, H, W, C = x.shape
    return x.reshape(B, H // k, k, W // k, k, C).mean(axis=(2, 4))


def _fold_bn(bn, eps=1e-5):
    inv = bn['gamma'] / jnp.sqrt(bn['var'] + eps)
    return inv, bn['beta'] - bn['mean'] * inv


def conv_bn_act(x_nhwc, w, bn, *, stride=1, padding=0, relu=True, residual=None):
    """conv(kxk, bias=False) + folded BN (+ residual) (+ ReLU) — one kernel."""
    Cout, Cin, kh, kw = w.shape
    B = x_nhwc.shape[0]
    if kh == 1 and kw == 1 and stride == 1 and padding == 0:
        Ho, Wo = x_nhwc.shape[1], x_nhwc.shape[2]
        patches = x_nhwc.reshape(B * Ho * Wo, Cin)
    else:
        patches, Ho, Wo = _im2col_nhwc(x_nhwc, kh, kw, stride, padding)
        patches = patches.reshape(B * Ho * Wo, kh * kw * Cin)
    wmat = jnp.transpose(w, (2, 3, 1, 0)).reshape(kh * kw * Cin, Cout)
    scale, bias = _fold_bn(bn)
    res2d = None if residual is None else residual.reshape(B * Ho * Wo, Cout)
    y = fused_matmul_affine(patches, wmat, scale, bias,
                            residual=res2d, relu=relu)
    return y.reshape(B, Ho, Wo, Cout)


# ---------------------------------------------------------------------------
# ModifiedResNet forward (Pallas path), NHWC internally
# ---------------------------------------------------------------------------
def bottleneck_forward(x_nhwc, p):
    stride = p['stride']
    out = conv_bn_act(x_nhwc, p['conv1_w'], p['bn1'], relu=True)
    out = conv_bn_act(out, p['conv2_w'], p['bn2'], padding=1, relu=True)
    out = _avg_pool_nhwc(out, stride)
    if 'down_conv_w' in p:
        idn = _avg_pool_nhwc(x_nhwc, stride)
        idn = conv_bn_act(idn, p['down_conv_w'], p['down_bn'], relu=False)
    else:
        idn = x_nhwc
    # conv3 + bn3 + residual add + relu fused into one kernel call
    return conv_bn_act(out, p['conv3_w'], p['bn3'], relu=True, residual=idn)


def attention_pool_forward(x_nhwc, p, num_heads):
    B, H, W, C = x_nhwc.shape
    L = H * W
    seq = x_nhwc.reshape(B, L, C).transpose(1, 0, 2)              # [L, B, C]
    seq = jnp.concatenate([seq.mean(axis=0, keepdims=True), seq], axis=0)
    seq = seq + p['pos_emb'][:, None, :]
    L1 = L + 1
    xt = seq.reshape(L1 * B, C)

    ones_c = jnp.ones((C,), xt.dtype)
    q = fused_matmul_affine(xt, p['q_w'].T, ones_c, p['q_b'])
    k = fused_matmul_affine(xt, p['k_w'].T, ones_c, p['k_b'])
    v = fused_matmul_affine(xt, p['v_w'].T, ones_c, p['v_b'])

    Dh = C // num_heads

    def to_heads(t):
        return (t.reshape(L1, B, num_heads, Dh)
                 .transpose(1, 2, 0, 3)
                 .reshape(B * num_heads, L1, Dh))

    o = mha_attention(to_heads(q), to_heads(k), to_heads(v), scale=Dh ** -0.5)
    o = (o.reshape(B, num_heads, L1, Dh)
          .transpose(2, 0, 1, 3)
          .reshape(L1 * B, C))

    out_dim = p['c_w'].shape[0]
    proj = fused_matmul_affine(o, p['c_w'].T,
                               jnp.ones((out_dim,), o.dtype), p['c_b'])
    return proj.reshape(L1, B, out_dim)


def modified_resnet_forward(x_nchw, params, num_heads):
    """Returns (x3, x4, xproj) like the PyTorch module."""
    x = jnp.transpose(x_nchw.astype(jnp.float32), (0, 2, 3, 1))   # NHWC
    s = params['stem']
    x = conv_bn_act(x, s['conv1_w'], s['bn1'], stride=2, padding=1, relu=True)
    x = conv_bn_act(x, s['conv2_w'], s['bn2'], padding=1, relu=True)
    x = conv_bn_act(x, s['conv3_w'], s['bn3'], padding=1, relu=True)
    x = _avg_pool_nhwc(x, 2)

    x3 = None
    for li, layer in enumerate(params['layers']):
        for bp in layer:
            x = bottleneck_forward(x, bp)
        if li == 2:
            x3 = x
    x4 = x
    xproj = attention_pool_forward(x4, params['attnpool'], num_heads)
    return (jnp.transpose(x3, (0, 3, 1, 2)),
            jnp.transpose(x4, (0, 3, 1, 2)),
            xproj)


# ---------------------------------------------------------------------------
# parameter construction
# ---------------------------------------------------------------------------
def _conv_init(key, cout, cin, k):
    fan_in = cin * k * k
    return jax.random.normal(key, (cout, cin, k, k), jnp.float32) / (fan_in ** 0.5)


def _bn_init(key, c):
    k1, k2, k3, k4 = jax.random.split(key, 4)
    return {
        'gamma': jax.random.uniform(k1, (c,), jnp.float32, 0.9, 1.1),
        'beta': 0.1 * jax.random.normal(k2, (c,), jnp.float32),
        'mean': 0.1 * jax.random.normal(k3, (c,), jnp.float32),
        'var': jax.random.uniform(k4, (c,), jnp.float32, 0.9, 1.1),
    }


def _linear_init(key, cout, cin):
    kw, kb = jax.random.split(key)
    w = jax.random.normal(kw, (cout, cin), jnp.float32) / (cin ** 0.5)
    b = 0.02 * jax.random.normal(kb, (cout,), jnp.float32)
    return w, b


def _bottleneck_init(key, inplanes, planes, stride):
    keys = jax.random.split(key, 8)
    p = {
        'conv1_w': _conv_init(keys[0], planes, inplanes, 1),
        'bn1': _bn_init(keys[1], planes),
        'conv2_w': _conv_init(keys[2], planes, planes, 3),
        'bn2': _bn_init(keys[3], planes),
        'conv3_w': _conv_init(keys[4], planes * 4, planes, 1),
        'bn3': _bn_init(keys[5], planes * 4),
        'stride': stride,
    }
    if stride > 1 or inplanes != planes * 4:
        p['down_conv_w'] = _conv_init(keys[6], planes * 4, inplanes, 1)
        p['down_bn'] = _bn_init(keys[7], planes * 4)
    return p


def init_params(key, layers, output_dim, heads, width, num_positions):
    ki = iter(jax.random.split(key, 16 + sum(layers)))
    params = {
        'stem': {
            'conv1_w': _conv_init(next(ki), width // 2, 3, 3),
            'bn1': _bn_init(next(ki), width // 2),
            'conv2_w': _conv_init(next(ki), width // 2, width // 2, 3),
            'bn2': _bn_init(next(ki), width // 2),
            'conv3_w': _conv_init(next(ki), width, width // 2, 3),
            'bn3': _bn_init(next(ki), width),
        }
    }
    inplanes = width
    all_layers = []
    strides = (1, 2, 2, 1)
    for li, nblocks in enumerate(layers):
        planes = width * (2 ** li)
        blocks = []
        for bi in range(nblocks):
            stride = strides[li] if bi == 0 else 1
            blocks.append(_bottleneck_init(next(ki), inplanes, planes, stride))
            inplanes = planes * 4
        all_layers.append(blocks)
    params['layers'] = all_layers

    embed_dim = width * 32
    kq, kk, kv, kc, kpos = jax.random.split(next(ki), 5)
    q_w, q_b = _linear_init(kq, embed_dim, embed_dim)
    k_w, k_b = _linear_init(kk, embed_dim, embed_dim)
    v_w, v_b = _linear_init(kv, embed_dim, embed_dim)
    c_w, c_b = _linear_init(kc, output_dim, embed_dim)
    params['attnpool'] = {
        'pos_emb': jax.random.normal(kpos, (num_positions + 1, embed_dim),
                                     jnp.float32) / (embed_dim ** 0.5),
        'q_w': q_w, 'q_b': q_b, 'k_w': k_w, 'k_b': k_b,
        'v_w': v_w, 'v_b': v_b, 'c_w': c_w, 'c_b': c_b,
    }
    return params


# ---------------------------------------------------------------------------
# pure-JAX reference (mirrors the PyTorch forward, eval mode)
# ---------------------------------------------------------------------------
def _conv_ref(x, w, stride=1, padding=0):
    return jax.lax.conv_general_dilated(
        x, w, (stride, stride), [(padding, padding), (padding, padding)],
        dimension_numbers=('NCHW', 'OIHW', 'NCHW'))


def _bn_ref(x, bn, eps=1e-5):
    inv = bn['gamma'] / jnp.sqrt(bn['var'] + eps)
    return (x * inv[None, :, None, None]
            + (bn['beta'] - bn['mean'] * inv)[None, :, None, None])


def _avg_pool_ref(x, k):
    if k == 1:
        return x
    B, C, H, W = x.shape
    return x.reshape(B, C, H // k, k, W // k, k).mean(axis=(3, 5))


def _bottleneck_ref(x, p):
    out = jax.nn.relu(_bn_ref(_conv_ref(x, p['conv1_w']), p['bn1']))
    out = jax.nn.relu(_bn_ref(_conv_ref(out, p['conv2_w'], padding=1), p['bn2']))
    out = _avg_pool_ref(out, p['stride'])
    out = _bn_ref(_conv_ref(out, p['conv3_w']), p['bn3'])
    if 'down_conv_w' in p:
        idn = _avg_pool_ref(x, p['stride'])
        idn = _bn_ref(_conv_ref(idn, p['down_conv_w']), p['down_bn'])
    else:
        idn = x
    return jax.nn.relu(out + idn)


def _attnpool_ref(x, p, num_heads):
    B, C, H, W = x.shape
    seq = x.reshape(B, C, H * W).transpose(2, 0, 1)               # [L, B, C]
    seq = jnp.concatenate([seq.mean(axis=0, keepdims=True), seq], axis=0)
    seq = seq + p['pos_emb'][:, None, :]
    L1 = seq.shape[0]
    q = seq @ p['q_w'].T + p['q_b']
    k = seq @ p['k_w'].T + p['k_b']
    v = seq @ p['v_w'].T + p['v_b']
    Dh = C // num_heads

    def h(t):
        return t.reshape(L1, B, num_heads, Dh).transpose(1, 2, 0, 3)

    s = jnp.einsum('bhld,bhmd->bhlm', h(q) * (Dh ** -0.5), h(k))
    a = jax.nn.softmax(s, axis=-1)
    o = jnp.einsum('bhlm,bhmd->bhld', a, h(v))
    o = o.transpose(2, 0, 1, 3).reshape(L1, B, C)
    return o @ p['c_w'].T + p['c_b']


def modified_resnet_ref(x, params, num_heads):
    s = params['stem']
    x = x.astype(jnp.float32)
    x = jax.nn.relu(_bn_ref(_conv_ref(x, s['conv1_w'], stride=2, padding=1), s['bn1']))
    x = jax.nn.relu(_bn_ref(_conv_ref(x, s['conv2_w'], padding=1), s['bn2']))
    x = jax.nn.relu(_bn_ref(_conv_ref(x, s['conv3_w'], padding=1), s['bn3']))
    x = _avg_pool_ref(x, 2)
    x3 = None
    for li, layer in enumerate(params['layers']):
        for bp in layer:
            x = _bottleneck_ref(x, bp)
        if li == 2:
            x3 = x
    x4 = x
    return x3, x4, _attnpool_ref(x4, params['attnpool'], num_heads)


# ---------------------------------------------------------------------------
if __name__ == "__main__":
    # Small ModifiedResNet: layers=(1,1,1,1), width=8 -> embed_dim=256,
    # heads=4, output_dim=64; 32x32 input -> final 2x2 feature map.
    B, R = 2, 32
    layers = (1, 1, 1, 1)
    width, heads, output_dim = 8, 4, 64
    feat = R // 16                       # final spatial side = 2

    key = jax.random.PRNGKey(0)
    kp, kx = jax.random.split(key)
    params = init_params(kp, layers, output_dim, heads, width, feat * feat)
    x = jax.random.normal(kx, (B, 3, R, R), jnp.float32)

    x3, x4, xproj = modified_resnet_forward(x, params, heads)
    x3, x4, xproj = jax.block_until_ready((x3, x4, xproj))

    r3, r4, rproj = modified_resnet_ref(x, params, heads)
    for name, got, want in (("x3", x3, r3), ("x4", x4, r4), ("xproj", xproj, rproj)):
        assert got.shape == want.shape, (name, got.shape, want.shape)
        assert jnp.allclose(got, want, atol=5e-2, rtol=5e-2), (
            f"{name} mismatch: max abs err "
            f"{float(jnp.max(jnp.abs(got - want)))}")
    print("KERNEL_OK")
</pallas_src>

<mosaic_0001>
module attributes {stable_mosaic.version = 11 : i64} {
  func.func @_mm_affine_kernel(%arg0: i32, %arg1: memref<256x32xf32, #tpu.memory_space<vmem>>, %arg2: memref<32x128xf32, #tpu.memory_space<vmem>>, %arg3: memref<1x128xf32, #tpu.memory_space<vmem>>, %arg4: memref<1x128xf32, #tpu.memory_space<vmem>>, %arg5: memref<256x128xf32, #tpu.memory_space<vmem>>) attributes {dimension_semantics = [#tpu.dimension_semantics<parallel>], iteration_bounds = array<i64: 2>, scalar_prefetch = 0 : i64, scratch_operands = 0 : i64, tpu.core_type = #tpu.core_type<tc>, window_params = [{transform_indices = @transform_0, window_bounds = array<i64: 256, 32>}, {pipeline_mode = #tpu.pipeline_mode<synchronous>, transform_indices = @transform_1, window_bounds = array<i64: 32, 128>}, {pipeline_mode = #tpu.pipeline_mode<synchronous>, transform_indices = @transform_2, window_bounds = array<i64: 1, 128>}, {pipeline_mode = #tpu.pipeline_mode<synchronous>, transform_indices = @transform_3, window_bounds = array<i64: 1, 128>}, {transform_indices = @transform_4, window_bounds = array<i64: 256, 128>}]} {
    %c0 = arith.constant 0 : index
    %c0_0 = arith.constant 0 : index
    %0 = vector.load %arg1[%c0, %c0_0] : memref<256x32xf32, #tpu.memory_space<vmem>>, vector<256x32xf32>
    %c0_1 = arith.constant 0 : index
    %c0_2 = arith.constant 0 : index
    %1 = vector.load %arg2[%c0_1, %c0_2] : memref<32x128xf32, #tpu.memory_space<vmem>>, vector<32x128xf32>
    %cst = arith.constant dense<0.000000e+00> : vector<256x128xf32>
    %2 = tpu.matmul %0, %1, %cst {dimension_numbers = #tpu.dot_dimension_numbers<[1], [0], [0], [1], [0, 0, 1, 1], [], []>} : vector<256x32xf32>, vector<32x128xf32>, vector<256x128xf32> -> vector<256x128xf32>
    %c0_3 = arith.constant 0 : index
    %c0_4 = arith.constant 0 : index
    %3 = vector.load %arg3[%c0_3, %c0_4] : memref<1x128xf32, #tpu.memory_space<vmem>>, vector<1x128xf32>
    %4 = vector.broadcast %3 : vector<1x128xf32> to vector<256x128xf32>
    %5 = arith.mulf %2, %4 : vector<256x128xf32>
    %c0_5 = arith.constant 0 : index
    %c0_6 = arith.constant 0 : index
    %6 = vector.load %arg4[%c0_5, %c0_6] : memref<1x128xf32, #tpu.memory_space<vmem>>, vector<1x128xf32>
    %7 = vector.broadcast %6 : vector<1x128xf32> to vector<256x128xf32>
    %8 = arith.addf %5, %7 : vector<256x128xf32>
    %cst_7 = arith.constant 0.000000e+00 : f32
    %9 = vector.broadcast %cst_7 : f32 to vector<256x128xf32>
    %10 = arith.maximumf %8, %9 : vector<256x128xf32>
    %c0_8 = arith.constant 0 : index
    %c0_9 = arith.constant 0 : index
    %11 = vector.load %arg5[%c0_8, %c0_9] : memref<256x128xf32, #tpu.memory_space<vmem>>, vector<256x128xf32>
    tpu.vector_store %arg5[%c0_8, %c0_9], %10 {strides = array<i32>} : memref<256x128xf32, #tpu.memory_space<vmem>>, vector<256x128xf32>,
    return
  }
  func.func @transform_0(%arg0: i32) -> (i32, i32) {
    %c0_i32 = arith.constant 0 : i32
    %c0_i32_0 = arith.constant 0 : i32
    return %arg0, %c0_i32 : i32, i32
  }
  func.func @transform_1(%arg0: i32) -> (i32, i32) {
    %c0_i32 = arith.constant 0 : i32
    %c0_i32_0 = arith.constant 0 : i32
    %c0_i32_1 = arith.constant 0 : i32
    return %c0_i32, %c0_i32_0 : i32, i32
  }
  func.func @transform_2(%arg0: i32) -> (i32, i32) {
    %c0_i32 = arith.constant 0 : i32
    %c0_i32_0 = arith.constant 0 : i32
    %c0_i32_1 = arith.constant 0 : i32
    return %c0_i32, %c0_i32_0 : i32, i32
  }
  func.func @transform_3(%arg0: i32) -> (i32, i32) {
    %c0_i32 = arith.constant 0 : i32
    %c0_i32_0 = arith.constant 0 : i32
    %c0_i32_1 = arith.constant 0 : i32
    return %c0_i32, %c0_i32_0 : i32, i32
  }
  func.func @transform_4(%arg0: i32) -> (i32, i32) {
    %c0_i32 = arith.constant 0 : i32
    %c0_i32_0 = arith.constant 0 : i32
    return %arg0, %c0_i32 : i32, i32
  }
}

</mosaic_0001>

<llo_original>
// kernel: tpu_custom_call.1
$region0: #{tpu_custom_call.1}
  #allocation0 [shape = 'u32[]', space=smem, size = 0x4, offset = 0x4, fixed_abs, tag = 'smem constant byte address 0x4 - core index']
  #allocation1 [shape = 'u32[144,128]{1,0:T(1,128)}', space=vmem, size = 0x12000, scoped, tag = 'internal scratch']
  %s0 = inlined_call_operand.vmem [shape: f32[512,32], index: 0, kind: input, shape index: {}]
  %s1 = inlined_call_operand.vmem [shape: f32[32,128], index: 1, kind: input, shape index: {}]
  %s2 = inlined_call_operand.vmem [shape: f32[1,128], index: 2, kind: input, shape index: {}]
  %s3 = inlined_call_operand.vmem [shape: f32[1,128], index: 3, kind: input, shape index: {}]
  %s4 = inlined_call_operand.hbm [shape: f32[512,128], index: 4, kind: output, shape index: {}]
  %s5 = sld [smem:[#allocation0]]
  $region49: #{tpu_custom_call.1} parent=0
    _
  %s7 = ssub.s32 1, %s5
  %s8 = scalar_select 0, %s7, %s5
  $region1: #{tpu_custom_call.1} parent=0
    #allocation2 [shape = 'u8[262144]{0}', space=vmem, size = 0x40000, scoped, tag = 'output window, operand 0']
    #allocation3 [shape = 's32[2]{0}', space=sflag, size = 0x8, scoped, tag = 'scoped memory for tpu_custom_call.1']
    %9 = vsyncpa [#allocation3], 0
    %s10 = scalar_lea.sflag [#allocation3], 1
    %11 = vsyncpa %s10, 0
    loop: start=0, step=1, limit=4
    $region2: #{tpu_custom_call.1} parent=1 // loop_pre_header
      _
    $region3: #{tpu_custom_call.1} parent=1 // loop_header
      %s13 = sphi 0, %s17
      %p14 = scmp.ge.s32.totalorder %s13, 4
      %s23 = sphi 0, %s25
      %s26 = sphi 0, %s23
      %s27 = sphi 0, %s26
      %s43 = sphi 0, %s27
      %s47 = sphi 0, %s47
      %s49 = sphi 0, %s47
      %s50 = sphi 0, %s49
      %s64 = sphi 0, %s50
      %s68 = sphi 0, %s68
      %s70 = sphi 0, %s68
      %s71 = sphi 0, %s70
      %s85 = sphi 0, %s71
      %s89 = sphi 0, %s89
      %s91 = sphi 0, %s89
      %s92 = sphi 0, %s91
      %s106 = sphi 0, %s92
      %s112 = sphi 0, %s114
      %s115 = sphi 0, %s112
      %s116 = sphi 0, %s115
      %s132 = sphi 0, %s116
    $region4: #{tpu_custom_call.1} parent=1 // loop_header_branch
      %16 = sbr.rel (%p14) target = $region8
    $region5: #{tpu_custom_call.1} parent=1 // loop_body
      %s18 = ssub.s32 %s13, 1
      %s19 = ssub.s32 %s13, 2
      %s20 = sadd.s32 %s13, 1
      %s21 = ssub.s32 %s13, %s20
      %p22 = scmp.eq.s32.totalorder %s21, 0
      %s24 = sadd.s32 %s23, 1
      %s25 = scalar_select %p22, %s23, %s24
      %p28 = pneg %p22
      %p29 = scmp.eq.s32.totalorder %s13, 1
      %p30 = por %p28, %p29
      %p31 = scmp.ne.s32.totalorder %s23, %s26
      %p32 = scmp.eq.s32.totalorder %s13, 0
      %p33 = por %p31, %p32
      %p34 = scmp.ne.s32.totalorder %s23, %s26
      %p35 = scmp.eq.s32.totalorder %s18, 1
      %p36 = por %p34, %p35
      %p37 = scmp.ne.s32.totalorder %s26, %s27
      %p38 = scmp.eq.s32.totalorder %s18, 0
      %p39 = por %p37, %p38
      %p40 = scmp.ne.s32.totalorder %s26, %s27
      %p41 = scmp.eq.s32.totalorder %s19, 1
      %p42 = por %p40, %p41
      %p44 = scmp.ne.s32.totalorder %s27, %s43
      %p45 = scmp.eq.s32.totalorder %s19, 0
      %p46 = por %p44, %p45
      %s48 = sadd.s32 %s47, 1
      %p51 = scmp.eq.s32.totalorder %s13, 1
      %p52 = scmp.ne.s32.totalorder %s47, %s49
      %p53 = scmp.eq.s32.totalorder %s13, 0
      %p54 = por %p52, %p53
      %p55 = scmp.ne.s32.totalorder %s47, %s49
      %p56 = scmp.eq.s32.totalorder %s18, 1
      %p57 = por %p55, %p56
      %p58 = scmp.ne.s32.totalorder %s49, %s50
      %p59 = scmp.eq.s32.totalorder %s18, 0
      %p60 = por %p58, %p59
      %p61 = scmp.ne.s32.totalorder %s49, %s50
      %p62 = scmp.eq.s32.totalorder %s19, 1
      %p63 = por %p61, %p62
      %p65 = scmp.ne.s32.totalorder %s50, %s64
      %p66 = scmp.eq.s32.totalorder %s19, 0
      %p67 = por %p65, %p66
      %s69 = sadd.s32 %s68, 1
      %p72 = scmp.eq.s32.totalorder %s13, 1
      %p73 = scmp.ne.s32.totalorder %s68, %s70
      %p74 = scmp.eq.s32.totalorder %s13, 0
      %p75 = por %p73, %p74
      %p76 = scmp.ne.s32.totalorder %s68, %s70
      %p77 = scmp.eq.s32.totalorder %s18, 1
      %p78 = por %p76, %p77
      %p79 = scmp.ne.s32.totalorder %s70, %s71
      %p80 = scmp.eq.s32.totalorder %s18, 0
      %p81 = por %p79, %p80
      %p82 = scmp.ne.s32.totalorder %s70, %s71
      %p83 = scmp.eq.s32.totalorder %s19, 1
      %p84 = por %p82, %p83
      %p86 = scmp.ne.s32.totalorder %s71, %s85
      %p87 = scmp.eq.s32.totalorder %s19, 0
      %p88 = por %p86, %p87
      %s90 = sadd.s32 %s89, 1
      %p93 = scmp.eq.s32.totalorder %s13, 1
      %p94 = scmp.ne.s32.totalorder %s89, %s91
      %p95 = scmp.eq.s32.totalorder %s13, 0
      %p96 = por %p94, %p95
      %p97 = scmp.ne.s32.totalorder %s89, %s91
      %p98 = scmp.eq.s32.totalorder %s18, 1
      %p99 = por %p97, %p98
      %p100 = scmp.ne.s32.totalorder %s91, %s92
      %p101 = scmp.eq.s32.totalorder %s18, 0
      %p102 = por %p100, %p101
      %p103 = scmp.ne.s32.totalorder %s91, %s92
      %p104 = scmp.eq.s32.totalorder %s19, 1
      %p105 = por %p103, %p104
      %p107 = scmp.ne.s32.totalorder %s92, %s106
      %p108 = scmp.eq.s32.totalorder %s19, 0
      %p109 = por %p107, %p108
      %s110 = ssub.s32 %s13, %s20
      %p111 = scmp.eq.s32.totalorder %s110, 0
      %s113 = sadd.s32 %s112, 1
      %s114 = scalar_select %p111, %s112, %s113
      %p117 = pneg %p111
      %p118 = scmp.eq.s32.totalorder %s13, 1
      %p119 = por %p117, %p118
      %p120 = scmp.ne.s32.totalorder %s112, %s115
      %p121 = scmp.eq.s32.totalorder %s13, 0
      %p122 = por %p120, %p121
      %p123 = scmp.ne.s32.totalorder %s112, %s115
      %p124 = scmp.eq.s32.totalorder %s18, 1
      %p125 = por %p123, %p124
      %p126 = scmp.ne.s32.totalorder %s115, %s116
      %p127 = scmp.eq.s32.totalorder %s18, 0
      %p128 = por %p126, %p127
      %p129 = scmp.ne.s32.totalorder %s115, %s116
      %p130 = scmp.eq.s32.totalorder %s19, 1
      %p131 = por %p129, %p130
      %p133 = scmp.ne.s32.totalorder %s116, %s132
      %p134 = scmp.eq.s32.totalorder %s19, 0
      %p135 = por %p133, %p134
      %p136 = scmp.le.s32.totalorder 1, %s13
      %p137 = scmp.lt.s32.totalorder %s13, 3
      %p138 = pnand %p136, %p137
      %p139 = pneg %p138
      // Predicated region
      $region9: #{tpu_custom_call.1} parent=5 // pred_check
        _
      $region10: #{tpu_custom_call.1} parent=5 // pred_check_branch
        %141 = sbr.rel (%p138) target = $region12
      $region11: #{tpu_custom_call.1} parent=5 // pred_region
        %s142 = ssub.s32 %s13, 1
        // Predicated region
        $region13: #{tpu_custom_call.1} parent=11 // pred_check
          %p143 = pneg %p60
        $region14: #{tpu_custom_call.1} parent=11 // pred_check_branch
          %145 = sbr.rel (%p143) target = $region16
        $region15: #{tpu_custom_call.1} parent=11 // pred_region
          _
        $region16: #{tpu_custom_call.1} parent=11 // pred_fallthru
          _
        // Predicated region
        $region17: #{tpu_custom_call.1} parent=11 // pred_check
          %p146 = pneg %p81
        $region18: #{tpu_custom_call.1} parent=11 // pred_check_branch
          %148 = sbr.rel (%p146) target = $region20
        $region19: #{tpu_custom_call.1} parent=11 // pred_region
          _
        $region20: #{tpu_custom_call.1} parent=11 // pred_fallthru
          _
        // Predicated region
        $region21: #{tpu_custom_call.1} parent=11 // pred_check
          %p149 = pneg %p102
        $region22: #{tpu_custom_call.1} parent=11 // pred_check_branch
          %151 = sbr.rel (%p149) target = $region24
        $region23: #{tpu_custom_call.1} parent=11 // pred_region
          _
        $region24: #{tpu_custom_call.1} parent=11 // pred_fallthru
          _
      $region12: #{tpu_custom_call.1} parent=5 // pred_fallthru
        _
      %p152 = scmp.lt.s32.totalorder %s13, 2
      // Predicated region
      $region25: #{tpu_custom_call.1} parent=5 // pred_check
        %p153 = pneg %p152
      $region26: #{tpu_custom_call.1} parent=5 // pred_check_branch
        %155 = sbr.rel (%p153) target = $region28
      $region27: #{tpu_custom_call.1} parent=5 // pred_region
        // Predicated region
        $region29: #{tpu_custom_call.1} parent=27 // pred_check
          %p156 = pneg %p33
        $region30: #{tpu_custom_call.1} parent=27 // pred_check_branch
          %158 = sbr.rel (%p156) target = $region32
        $region31: #{tpu_custom_call.1} parent=27 // pred_region
          %s159 = smul.u32 32, %s13
          %p160 = scmp.lt.s32.totalorder %s159, 63
          %s161 = scalar_select %p160, %s159, 63
          %s162 = smul.addr %s161, 8
          %s163 = scalar_lea.vmem %s0, %s162
          %s164 = smul.u32 32, %s13
        $region32: #{tpu_custom_call.1} parent=27 // pred_fallthru
          _
      $region28: #{tpu_custom_call.1} parent=5 // pred_fallthru
        _
      %p165 = scmp.le.s32.totalorder 1, %s13
      %p166 = scmp.lt.s32.totalorder %s13, 3
      %p167 = pnand %p165, %p166
      %p168 = pneg %p167
      // Predicated region
      $region33: #{tpu_custom_call.1} parent=5 // pred_check
        _
      $region34: #{tpu_custom_call.1} parent=5 // pred_check_branch
        %170 = sbr.rel (%p167) target = $region36
      $region35: #{tpu_custom_call.1} parent=5 // pred_region
        %s171 = ssub.s32 %s13, 1
        %s172 = smul.u32 32, %s18
        %p173 = scmp.lt.s32.totalorder %s172, 63
        %s174 = scalar_select %p173, %s172, 63
        %s175 = smul.addr %s174, 8
        %s176 = scalar_lea.vmem %s0, %s175
        %p177 = pneg %p39
        %p178 = pneg %p36
        %p179 = pneg %p60
        %p180 = pneg %p57
        %p181 = pneg %p81
        %p182 = pneg %p78
        %p183 = pneg %p102
        %p184 = pneg %p99
        %p185 = pneg %p128
        %p186 = pneg %p125
        %s187 = sand.u32 %s115, 1
        %s188 = scalar_lea.sflag [#allocation3], %s187
        %s189 = sand.u32 %s115, 1
        %s190 = smul.addr %s189, 256
        %s191 = scalar_lea.vmem [#allocation2], %s190
        %s192 = smul.u32 32, %s18
        %p193 = scmp.lt.s32.totalorder %s192, 63
        %s194 = scalar_select %p193, %s192, 63
        %s195 = smul.addr %s194, 8
        %s196 = scalar_lea.vmem %s0, %s195
        %s197 = smul.u32 32, %s18
        %s198 = smul.u32 32, %s18
        %v199 = vld [vmem:[%s196] sm:$0xff]
        %v200 = vld [vmem:[%s196 + $0x8] sm:$0xff]
        %v201 = vld [vmem:[%s196 + $0x10] sm:$0xff]
        %v202 = vld [vmem:[%s196 + $0x18] sm:$0xff]
        %v203 = vld [vmem:[%s196 + $0x20] sm:$0xff]
        %v204 = vld [vmem:[%s196 + $0x28] sm:$0xff]
        %v205 = vld [vmem:[%s196 + $0x30] sm:$0xff]
        %v206 = vld [vmem:[%s196 + $0x38] sm:$0xff]
        %v207 = vld [vmem:[%s196 + $0x40] sm:$0xff]
        %v208 = vld [vmem:[%s196 + $0x48] sm:$0xff]
        %v209 = vld [vmem:[%s196 + $0x50] sm:$0xff]
        %v210 = vld [vmem:[%s196 + $0x58] sm:$0xff]
        %v211 = vld [vmem:[%s196 + $0x60] sm:$0xff]
        %v212 = vld [vmem:[%s196 + $0x68] sm:$0xff]
        %v213 = vld [vmem:[%s196 + $0x70] sm:$0xff]
        %v214 = vld [vmem:[%s196 + $0x78] sm:$0xff]
        %v215 = vld [vmem:[%s196 + $0x80] sm:$0xff]
        %v216 = vld [vmem:[%s196 + $0x88] sm:$0xff]
        %v217 = vld [vmem:[%s196 + $0x90] sm:$0xff]
        %v218 = vld [vmem:[%s196 + $0x98] sm:$0xff]
        %v219 = vld [vmem:[%s196 + $0xa0] sm:$0xff]
        %v220 = vld [vmem:[%s196 + $0xa8] sm:$0xff]
        %v221 = vld [vmem:[%s196 + $0xb0] sm:$0xff]
        %v222 = vld [vmem:[%s196 + $0xb8] sm:$0xff]
        %v223 = vld [vmem:[%s196 + $0xc0] sm:$0xff]
        %v224 = vld [vmem:[%s196 + $0xc8] sm:$0xff]
        %v225 = vld [vmem:[%s196 + $0xd0] sm:$0xff]
        %v226 = vld [vmem:[%s196 + $0xd8] sm:$0xff]
        %v227 = vld [vmem:[%s196 + $0xe0] sm:$0xff]
        %v228 = vld [vmem:[%s196 + $0xe8] sm:$0xff]
        %v229 = vld [vmem:[%s196 + $0xf0] sm:$0xff]
        %v230 = vld [vmem:[%s196 + $0xf8] sm:$0xff]
        %v231 = vld [vmem:[%s1] sm:$0xff]
        %v232 = vld [vmem:[%s1 + $0x8] sm:$0xff]
        %v233 = vld [vmem:[%s1 + $0x10] sm:$0xff]
        %v234 = vld [vmem:[%s1 + $0x18] sm:$0xff]
        %vm235 = vcmask 261120
        %v237 = vsel %vm235, %v199, 0
        %v240 = vsel %vm235, %v200, 0
        %v243 = vsel %vm235, %v201, 0
        %v246 = vsel %vm235, %v202, 0
        %v249 = vsel %vm235, %v203, 0
        %v252 = vsel %vm235, %v204, 0
        %v255 = vsel %vm235, %v205, 0
        %v258 = vsel %vm235, %v206, 0
        %v261 = vsel %vm235, %v207, 0
        %v264 = vsel %vm235, %v208, 0
        %v267 = vsel %vm235, %v209, 0
        %v270 = vsel %vm235, %v210, 0
        %v273 = vsel %vm235, %v211, 0
        %v276 = vsel %vm235, %v212, 0
        %v279 = vsel %vm235, %v213, 0
        %v282 = vsel %vm235, %v214, 0
        %v285 = vsel %vm235, %v215, 0
        %v288 = vsel %vm235, %v216, 0
        %v291 = vsel %vm235, %v217, 0
        %v294 = vsel %vm235, %v218, 0
        %v297 = vsel %vm235, %v219, 0
        %v300 = vsel %vm235, %v220, 0
        %v303 = vsel %vm235, %v221, 0
        %v306 = vsel %vm235, %v222, 0
        %v309 = vsel %vm235, %v223, 0
        %v312 = vsel %vm235, %v224, 0
        %v315 = vsel %vm235, %v225, 0
        %v318 = vsel %vm235, %v226, 0
        %v321 = vsel %vm235, %v227, 0
        %v324 = vsel %vm235, %v228, 0
        %v327 = vsel %vm235, %v229, 0
        %v330 = vsel %vm235, %v230, 0
        %332 = vmatprep.subr.mxu0 0.0
        %333 = vmatpush1.msra.mxu0 0.0
        %334 = vmatprep.subr.mxu0 0.0
        %335 = vmatpush1.msra.mxu0 0.0
        %336 = vmatprep.subr.mxu0 0.0
        %337 = vmatpush1.msra.mxu0 0.0
        %338 = vmatprep.subr.mxu0 0.0
        %339 = vmatpush1.msra.mxu0 0.0
        %340 = vmatprep.subr.mxu0 0.0
        %341 = vmatpush1.msra.mxu0 0.0
        %342 = vmatprep.subr.mxu0 0.0
        %343 = vmatpush1.msra.mxu0 0.0
        %344 = vmatprep.subr.mxu0 0.0
        %345 = vmatpush1.msra.mxu0 0.0
        %346 = vmatprep.subr.mxu0 0.0
        %347 = vmatpush1.msra.mxu0 0.0
        %348 = vmatprep.subr.mxu0 0.0
        %349 = vmatpush1.msra.mxu0 0.0
        %350 = vmatprep.subr.mxu0 0.0
        %351 = vmatpush1.msra.mxu0 0.0
        %352 = vmatprep.subr.mxu0 0.0
        %353 = vmatpush1.msra.mxu0 0.0
        %354 = vmatprep.subr.mxu0 0.0
        %355 = vmatpush1.msra.mxu0 0.0
        %356 = vmatprep.subr.mxu0 0.0
        %357 = vmatpush1.msra.mxu0 %v234
        %358 = vmatprep.subr.mxu0 0.0
        %359 = vmatpush1.msra.mxu0 %v233
        %360 = vmatprep.subr.mxu0 0.0
        %361 = vmatpush1.msra.mxu0 %v232
        %362 = vmatprep.subr.mxu0 0.0
        %363 = vmatpush1.msra.mxu0 %v231
        %364 = vmatprep.subr.mxu0 0.0
        %365 = vmatpush2.msra.mxu0 0.0
        %366 = vmatprep.subr.mxu0 0.0
        %367 = vmatpush2.msra.mxu0 0.0
        %368 = vmatprep.subr.mxu0 0.0
        %369 = vmatpush2.msra.mxu0 0.0
        %370 = vmatprep.subr.mxu0 0.0
        %371 = vmatpush2.msra.mxu0 0.0
        %372 = vmatprep.subr.mxu0 0.0
        %373 = vmatpush2.msra.mxu0 0.0
        %374 = vmatprep.subr.mxu0 0.0
        %375 = vmatpush2.msra.mxu0 0.0
        %376 = vmatprep.subr.mxu0 0.0
        %377 = vmatpush2.msra.mxu0 0.0
        %378 = vmatprep.subr.mxu0 0.0
        %379 = vmatpush2.msra.mxu0 0.0
        %380 = vmatprep.subr.mxu0 0.0
        %381 = vmatpush2.msra.mxu0 0.0
        %382 = vmatprep.subr.mxu0 0.0
        %383 = vmatpush2.msra.mxu0 0.0
        %384 = vmatprep.subr.mxu0 0.0
        %385 = vmatpush2.msra.mxu0 0.0
        %386 = vmatprep.subr.mxu0 0.0
        %387 = vmatpush2.msra.mxu0 0.0
        %388 = vmatprep.subr.mxu0 0.0
        %389 = vmatpush2.msra.mxu0 0.0
        %390 = vmatprep.subr.mxu0 0.0
        %391 = vmatpush2.msra.mxu0 0.0
        %392 = vmatprep.subr.mxu0 0.0
        %393 = vmatpush2.msra.mxu0 0.0
        %394 = vmatprep.subr.mxu0 0.0
        %395 = vmatpush2.msra.mxu0 0.0
        %396 = vmatprep.mubr.f32.mxu0 0.0
        %397 = vmatmul.mubr.f32.gmra.mxu0 %v237
        %v398 = vpop.f32.mrf.mxu0
        %v399 = vadd.f32 0.0, %v398
        %v400 = vpop.f32.mrf.mxu0
        %401 = vmatprep.mubr.f32.mxu0 0.0
        %402 = vmatmul.mubr.f32.gmra.mxu0 %v240
        %v403 = vpop.f32.mrf.mxu0
        %v404 = vadd.f32 0.0, %v403
        %v405 = vpop.f32.mrf.mxu0
        %406 = vmatprep.mubr.f32.mxu0 0.0
        %407 = vmatmul.mubr.f32.gmra.mxu0 %v243
        %v408 = vpop.f32.mrf.mxu0
        %v409 = vadd.f32 0.0, %v408
        %v410 = vpop.f32.mrf.mxu0
        %411 = vmatprep.mubr.f32.mxu0 0.0
        %412 = vmatmul.mubr.f32.gmra.mxu0 %v246
        %v413 = vpop.f32.mrf.mxu0
        %v414 = vadd.f32 0.0, %v413
        %v415 = vpop.f32.mrf.mxu0
        %416 = vmatprep.mubr.f32.mxu0 0.0
        %417 = vmatmul.mubr.f32.gmra.mxu0 %v249
        %v418 = vpop.f32.mrf.mxu0
        %v419 = vadd.f32 0.0, %v418
        %v420 = vpop.f32.mrf.mxu0
        %421 = vmatprep.mubr.f32.mxu0 0.0
        %422 = vmatmul.mubr.f32.gmra.mxu0 %v252
        %v423 = vpop.f32.mrf.mxu0
        %v424 = vadd.f32 0.0, %v423
        %v425 = vpop.f32.mrf.mxu0
        %426 = vmatprep.mubr.f32.mxu0 0.0
        %427 = vmatmul.mubr.f32.gmra.mxu0 %v255
        %v428 = vpop.f32.mrf.mxu0
        %v429 = vadd.f32 0.0, %v428
        %v430 = vpop.f32.mrf.mxu0
        %431 = vmatprep.mubr.f32.mxu0 0.0
        %432 = vmatmul.mubr.f32.gmra.mxu0 %v258
        %v433 = vpop.f32.mrf.mxu0
        %v434 = vadd.f32 0.0, %v433
        %v435 = vpop.f32.mrf.mxu0
        %436 = vmatprep.mubr.f32.mxu0 0.0
        %437 = vmatmul.mubr.f32.gmra.mxu0 %v261
        %v438 = vpop.f32.mrf.mxu0
        %v439 = vadd.f32 0.0, %v438
        %v440 = vpop.f32.mrf.mxu0
        %441 = vmatprep.mubr.f32.mxu0 0.0
        %442 = vmatmul.mubr.f32.gmra.mxu0 %v264
        %v443 = vpop.f32.mrf.mxu0
        %v444 = vadd.f32 0.0, %v443
        %v445 = vpop.f32.mrf.mxu0
        %446 = vmatprep.mubr.f32.mxu0 0.0
        %447 = vmatmul.mubr.f32.gmra.mxu0 %v267
        %v448 = vpop.f32.mrf.mxu0
        %v449 = vadd.f32 0.0, %v448
        %v450 = vpop.f32.mrf.mxu0
        %451 = vmatprep.mubr.f32.mxu0 0.0
        %452 = vmatmul.mubr.f32.gmra.mxu0 %v270
        %v453 = vpop.f32.mrf.mxu0
        %v454 = vadd.f32 0.0, %v453
        %v455 = vpop.f32.mrf.mxu0
        %456 = vmatprep.mubr.f32.mxu0 0.0
        %457 = vmatmul.mubr.f32.gmra.mxu0 %v273
        %v458 = vpop.f32.mrf.mxu0
        %v459 = vadd.f32 0.0, %v458
        %v460 = vpop.f32.mrf.mxu0
        %461 = vmatprep.mubr.f32.mxu0 0.0
        %462 = vmatmul.mubr.f32.gmra.mxu0 %v276
        %v463 = vpop.f32.mrf.mxu0
        %v464 = vadd.f32 0.0, %v463
        %v465 = vpop.f32.mrf.mxu0
        %466 = vmatprep.mubr.f32.mxu0 0.0
        %467 = vmatmul.mubr.f32.gmra.mxu0 %v279
        %v468 = vpop.f32.mrf.mxu0
        %v469 = vadd.f32 0.0, %v468
        %v470 = vpop.f32.mrf.mxu0
        %471 = vmatprep.mubr.f32.mxu0 0.0
        %472 = vmatmul.mubr.f32.gmra.mxu0 %v282
        %v473 = vpop.f32.mrf.mxu0
        %v474 = vadd.f32 0.0, %v473
        %v475 = vpop.f32.mrf.mxu0
        %476 = vmatprep.mubr.f32.mxu0 0.0
        %477 = vmatmul.mubr.f32.gmra.mxu0 %v285
        %v478 = vpop.f32.mrf.mxu0
        %v479 = vadd.f32 0.0, %v478
        %v480 = vpop.f32.mrf.mxu0
        %481 = vmatprep.mubr.f32.mxu0 0.0
        %482 = vmatmul.mubr.f32.gmra.mxu0 %v288
        %v483 = vpop.f32.mrf.mxu0
        %v484 = vadd.f32 0.0, %v483
        %v485 = vpop.f32.mrf.mxu0
        %486 = vmatprep.mubr.f32.mxu0 0.0
        %487 = vmatmul.mubr.f32.gmra.mxu0 %v291
        %v488 = vpop.f32.mrf.mxu0
        %v489 = vadd.f32 0.0, %v488
        %v490 = vpop.f32.mrf.mxu0
        %491 = vmatprep.mubr.f32.mxu0 0.0
        %492 = vmatmul.mubr.f32.gmra.mxu0 %v294
        %v493 = vpop.f32.mrf.mxu0
        %v494 = vadd.f32 0.0, %v493
        %v495 = vpop.f32.mrf.mxu0
        %496 = vmatprep.mubr.f32.mxu0 0.0
        %497 = vmatmul.mubr.f32.gmra.mxu0 %v297
        %v498 = vpop.f32.mrf.mxu0
        %v499 = vadd.f32 0.0, %v498
        %v500 = vpop.f32.mrf.mxu0
        %501 = vmatprep.mubr.f32.mxu0 0.0
        %502 = vmatmul.mubr.f32.gmra.mxu0 %v300
        %v503 = vpop.f32.mrf.mxu0
        %v504 = vadd.f32 0.0, %v503
        %v505 = vpop.f32.mrf.mxu0
        %506 = vmatprep.mubr.f32.mxu0 0.0
        %507 = vmatmul.mubr.f32.gmra.mxu0 %v303
        %v508 = vpop.f32.mrf.mxu0
        %v509 = vadd.f32 0.0, %v508
        %v510 = vpop.f32.mrf.mxu0
        %511 = vmatprep.mubr.f32.mxu0 0.0
        %512 = vmatmul.mubr.f32.gmra.mxu0 %v306
        %v513 = vpop.f32.mrf.mxu0
        %v514 = vadd.f32 0.0, %v513
        %v515 = vpop.f32.mrf.mxu0
        %516 = vmatprep.mubr.f32.mxu0 0.0
        %517 = vmatmul.mubr.f32.gmra.mxu0 %v309
        %v518 = vpop.f32.mrf.mxu0
        %v519 = vadd.f32 0.0, %v518
        %v520 = vpop.f32.mrf.mxu0
        %521 = vmatprep.mubr.f32.mxu0 0.0
        %522 = vmatmul.mubr.f32.gmra.mxu0 %v312
        %v523 = vpop.f32.mrf.mxu0
        %v524 = vadd.f32 0.0, %v523
        %v525 = vpop.f32.mrf.mxu0
        %526 = vmatprep.mubr.f32.mxu0 0.0
        %527 = vmatmul.mubr.f32.gmra.mxu0 %v315
        %v528 = vpop.f32.mrf.mxu0
        %v529 = vadd.f32 0.0, %v528
        %v530 = vpop.f32.mrf.mxu0
        %531 = vmatprep.mubr.f32.mxu0 0.0
        %532 = vmatmul.mubr.f32.gmra.mxu0 %v318
        %v533 = vpop.f32.mrf.mxu0
        %v534 = vadd.f32 0.0, %v533
        %v535 = vpop.f32.mrf.mxu0
        %536 = vmatprep.mubr.f32.mxu0 0.0
        %537 = vmatmul.mubr.f32.gmra.mxu0 %v321
        %v538 = vpop.f32.mrf.mxu0
        %v539 = vadd.f32 0.0, %v538
        %v540 = vpop.f32.mrf.mxu0
        %541 = vmatprep.mubr.f32.mxu0 0.0
        %542 = vmatmul.mubr.f32.gmra.mxu0 %v324
        %v543 = vpop.f32.mrf.mxu0
        %v544 = vadd.f32 0.0, %v543
        %v545 = vpop.f32.mrf.mxu0
        %546 = vmatprep.mubr.f32.mxu0 0.0
        %547 = vmatmul.mubr.f32.gmra.mxu0 %v327
        %v548 = vpop.f32.mrf.mxu0
        %v549 = vadd.f32 0.0, %v548
        %v550 = vpop.f32.mrf.mxu0
        %551 = vmatprep.mubr.f32.mxu0 0.0
        %552 = vmatmul.mubr.f32.gmra.mxu0 %v330
        %v553 = vpop.f32.mrf.mxu0
        %v554 = vadd.f32 0.0, %v553
        %v555 = vpop.f32.mrf.mxu0
        %556 = vdwg.mxu0
        %v557 = vld [vmem:[%s2] sm:$0x1]
        %v559 = vlaneseq
        %v560 = vshrl.u32 %v559, 7
        %v561 = vsub.s32 0, %v560
        %v562 = vrot.slane %v557, %v561
        %v564 = vmul.f32 %v399, %v562
        %v565 = vmul.f32 %v404, %v562
        %v566 = vmul.f32 %v409, %v562
        %v567 = vmul.f32 %v414, %v562
        %v568 = vmul.f32 %v419, %v562
        %v569 = vmul.f32 %v424, %v562
        %v570 = vmul.f32 %v429, %v562
        %v571 = vmul.f32 %v434, %v562
        %v572 = vmul.f32 %v439, %v562
        %v573 = vmul.f32 %v444, %v562
        %v574 = vmul.f32 %v449, %v562
        %v575 = vmul.f32 %v454, %v562
        %v576 = vmul.f32 %v459, %v562
        %v577 = vmul.f32 %v464, %v562
        %v578 = vmul.f32 %v469, %v562
        %v579 = vmul.f32 %v474, %v562
        %v580 = vmul.f32 %v479, %v562
        %v581 = vmul.f32 %v484, %v562
        %v582 = vmul.f32 %v489, %v562
        %v583 = vmul.f32 %v494, %v562
        %v584 = vmul.f32 %v499, %v562
        %v585 = vmul.f32 %v504, %v562
        %v586 = vmul.f32 %v509, %v562
        %v587 = vmul.f32 %v514, %v562
        %v588 = vmul.f32 %v519, %v562
        %v589 = vmul.f32 %v524, %v562
        %v590 = vmul.f32 %v529, %v562
        %v591 = vmul.f32 %v534, %v562
        %v592 = vmul.f32 %v539, %v562
        %v593 = vmul.f32 %v544, %v562
        %v594 = vmul.f32 %v549, %v562
        %v595 = vmul.f32 %v554, %v562
        %v596 = vld [vmem:[%s3] sm:$0x1]
        %v598 = vlaneseq
        %v599 = vshrl.u32 %v598, 7
        %v600 = vsub.s32 0, %v599
        %v601 = vrot.slane %v596, %v600
        %v603 = vadd.f32 %v564, %v601
        %v604 = vadd.f32 %v565, %v601
        %v605 = vadd.f32 %v566, %v601
        %v606 = vadd.f32 %v567, %v601
        %v607 = vadd.f32 %v568, %v601
        %v608 = vadd.f32 %v569, %v601
        %v609 = vadd.f32 %v570, %v601
        %v610 = vadd.f32 %v571, %v601
        %v611 = vadd.f32 %v572, %v601
        %v612 = vadd.f32 %v573, %v601
        %v613 = vadd.f32 %v574, %v601
        %v614 = vadd.f32 %v575, %v601
        %v615 = vadd.f32 %v576, %v601
        %v616 = vadd.f32 %v577, %v601
        %v617 = vadd.f32 %v578, %v601
        %v618 = vadd.f32 %v579, %v601
        %v619 = vadd.f32 %v580, %v601
        %v620 = vadd.f32 %v581, %v601
        %v621 = vadd.f32 %v582, %v601
        %v622 = vadd.f32 %v583, %v601
        %v623 = vadd.f32 %v584, %v601
        %v624 = vadd.f32 %v585, %v601
        %v625 = vadd.f32 %v586, %v601
        %v626 = vadd.f32 %v587, %v601
        %v627 = vadd.f32 %v588, %v601
        %v628 = vadd.f32 %v589, %v601
        %v629 = vadd.f32 %v590, %v601
        %v630 = vadd.f32 %v591, %v601
        %v631 = vadd.f32 %v592, %v601
        %v632 = vadd.f32 %v593, %v601
        %v633 = vadd.f32 %v594, %v601
        %v634 = vadd.f32 %v595, %v601
        %v635 = vmax.f32 %v603, 0.0
        %v636 = vmax.f32 %v604, 0.0
        %v637 = vmax.f32 %v605, 0.0
        %v638 = vmax.f32 %v606, 0.0
        %v639 = vmax.f32 %v607, 0.0
        %v640 = vmax.f32 %v608, 0.0
        %v641 = vmax.f32 %v609, 0.0
        %v642 = vmax.f32 %v610, 0.0
        %v643 = vmax.f32 %v611, 0.0
        %v644 = vmax.f32 %v612, 0.0
        %v645 = vmax.f32 %v613, 0.0
        %v646 = vmax.f32 %v614, 0.0
        %v647 = vmax.f32 %v615, 0.0
        %v648 = vmax.f32 %v616, 0.0
        %v649 = vmax.f32 %v617, 0.0
        %v650 = vmax.f32 %v618, 0.0
        %v651 = vmax.f32 %v619, 0.0
        %v652 = vmax.f32 %v620, 0.0
        %v653 = vmax.f32 %v621, 0.0
        %v654 = vmax.f32 %v622, 0.0
        %v655 = vmax.f32 %v623, 0.0
        %v656 = vmax.f32 %v624, 0.0
        %v657 = vmax.f32 %v625, 0.0
        %v658 = vmax.f32 %v626, 0.0
        %v659 = vmax.f32 %v627, 0.0
        %v660 = vmax.f32 %v628, 0.0
        %v661 = vmax.f32 %v629, 0.0
        %v662 = vmax.f32 %v630, 0.0
        %v663 = vmax.f32 %v631, 0.0
        %v664 = vmax.f32 %v632, 0.0
        %v665 = vmax.f32 %v633, 0.0
        %v666 = vmax.f32 %v634, 0.0
        %667 = vst [vmem:[%s191] sm:$0xff] %v635
        %668 = vst [vmem:[%s191 + $0x8] sm:$0xff] %v636
        %669 = vst [vmem:[%s191 + $0x10] sm:$0xff] %v637
        %670 = vst [vmem:[%s191 + $0x18] sm:$0xff] %v638
        %671 = vst [vmem:[%s191 + $0x20] sm:$0xff] %v639
        %672 = vst [vmem:[%s191 + $0x28] sm:$0xff] %v640
        %673 = vst [vmem:[%s191 + $0x30] sm:$0xff] %v641
        %674 = vst [vmem:[%s191 + $0x38] sm:$0xff] %v642
        %675 = vst [vmem:[%s191 + $0x40] sm:$0xff] %v643
        %676 = vst [vmem:[%s191 + $0x48] sm:$0xff] %v644
        %677 = vst [vmem:[%s191 + $0x50] sm:$0xff] %v645
        %678 = vst [vmem:[%s191 + $0x58] sm:$0xff] %v646
        %679 = vst [vmem:[%s191 + $0x60] sm:$0xff] %v647
        %680 = vst [vmem:[%s191 + $0x68] sm:$0xff] %v648
        %681 = vst [vmem:[%s191 + $0x70] sm:$0xff] %v649
        %682 = vst [vmem:[%s191 + $0x78] sm:$0xff] %v650
        %683 = vst [vmem:[%s191 + $0x80] sm:$0xff] %v651
        %684 = vst [vmem:[%s191 + $0x88] sm:$0xff] %v652
        %685 = vst [vmem:[%s191 + $0x90] sm:$0xff] %v653
        %686 = vst [vmem:[%s191 + $0x98] sm:$0xff] %v654
        %687 = vst [vmem:[%s191 + $0xa0] sm:$0xff] %v655
        %688 = vst [vmem:[%s191 + $0xa8] sm:$0xff] %v656
        %689 = vst [vmem:[%s191 + $0xb0] sm:$0xff] %v657
        %690 = vst [vmem:[%s191 + $0xb8] sm:$0xff] %v658
        %691 = vst [vmem:[%s191 + $0xc0] sm:$0xff] %v659
        %692 = vst [vmem:[%s191 + $0xc8] sm:$0xff] %v660
        %693 = vst [vmem:[%s191 + $0xd0] sm:$0xff] %v661
        %694 = vst [vmem:[%s191 + $0xd8] sm:$0xff] %v662
        %695 = vst [vmem:[%s191 + $0xe0] sm:$0xff] %v663
        %696 = vst [vmem:[%s191 + $0xe8] sm:$0xff] %v664
        %697 = vst [vmem:[%s191 + $0xf0] sm:$0xff] %v665
        %698 = vst [vmem:[%s191 + $0xf8] sm:$0xff] %v666
        %s699 = sand.u32 %s115, 1
        %s700 = scalar_lea.sflag [#allocation3], %s699
        %s701 = sand.u32 %s115, 1
        %s702 = smul.addr %s701, 256
        %s703 = scalar_lea.vmem [#allocation2], %s702
        // Predicated region
        $region37: #{tpu_custom_call.1} parent=35 // pred_check
          %p704 = pneg %p125
        $region38: #{tpu_custom_call.1} parent=35 // pred_check_branch
          %706 = sbr.rel (%p704) target = $region40
        $region39: #{tpu_custom_call.1} parent=35 // pred_region
          %s707 = smul.u32 32, %s18
          %s709 = ssub.s32 4096, 4096
          %710 = vsyncadd %s700, %s709
          %s711 = smul.addr %s707, 128
          %s712 = scalar_lea.hbm %s4, %s711
          %s713 = sshll.u32 %s703, 4
          %s714 = int_to_ptr.vmem [resolvable:$true] %s713
          %719 = dma.vmem_to_hbm [thread:$0]  %s714, 4096, %s712, %s700, 128, 128, 8
        $region40: #{tpu_custom_call.1} parent=35 // pred_fallthru
          _
      $region36: #{tpu_custom_call.1} parent=5 // pred_fallthru
        _
      %p720 = scmp.le.s32.totalorder 2, %s13
      // Predicated region
      $region41: #{tpu_custom_call.1} parent=5 // pred_check
        %p721 = pneg %p720
      $region42: #{tpu_custom_call.1} parent=5 // pred_check_branch
        %723 = sbr.rel (%p721) target = $region44
      $region43: #{tpu_custom_call.1} parent=5 // pred_region
        %s724 = ssub.s32 %s13, 2
        // Predicated region
        $region45: #{tpu_custom_call.1} parent=43 // pred_check
          %p725 = pneg %p131
        $region46: #{tpu_custom_call.1} parent=43 // pred_check_branch
          %727 = sbr.rel (%p725) target = $region48
        $region47: #{tpu_custom_call.1} parent=43 // pred_region
          %s728 = sand.u32 %s116, 1
          %s729 = scalar_lea.sflag [#allocation3], %s728
          %s730 = sand.u32 %s116, 1
          %s731 = smul.addr %s730, 256
          %s732 = scalar_lea.vmem [#allocation2], %s731
          %733 = dma.done %s729, 4096
        $region48: #{tpu_custom_call.1} parent=43 // pred_fallthru
          _
      $region44: #{tpu_custom_call.1} parent=5 // pred_fallthru
        _
    $region6: #{tpu_custom_call.1} parent=1 // loop_footer
      %s17 = sadd.s32 1, %s13
    $region7: #{tpu_custom_call.1} parent=1 // loop_footer_branch
      %12 = sbr.rel target = $region3
    $region8: #{tpu_custom_call.1} parent=1 // loop_exit
      _
    %734 = vsyncpa [#allocation3], 1
    %s735 = scalar_lea.sflag [#allocation3], 1
    %736 = vsyncpa %s735, 1

</llo_original>
